<compile_context>
chip_gen: v7x
topology: tpu7x:2x2x1
jax: 0.10.0
libtpu: 0.0.40
codegen_flags: <defaults>
</compile_context>

<pallas_src>
import functools

import numpy as np
import jax
import jax.numpy as jnp
from jax import lax
from jax.experimental import pallas as pl
from jax.experimental.pallas import tpu as pltpu

OMEGA = np.pi / 5.0


# ---------------------------------------------------------------------------
# Parameter preparation (once per solve, NOT once per RHS evaluation).
# ---------------------------------------------------------------------------
def prepare_odefunc_params(weight, bias):
    """Split/cast the nn.Linear(3*dim, dim) parameters for the kernels.

    Returns (w_xv, w_c, b2):
      w_xv : (2*cutoff, dim)  == weight[:, :2*cutoff].T  (rows for the [x|v] inputs)
      w_c  : (1, dim)         == weight[:, 2*cutoff]     (row for the cos(omega*t) input)
      b2   : (1, dim)
    """
    dim, three_dim = weight.shape
    assert three_dim == 3 * dim, "fc must be Linear(3*dim, dim)"
    n = three_dim - 1                               # == 2*cutoff
    w = jnp.asarray(weight, jnp.float32)
    w_xv = w[:, :n].T                               # (n, dim)
    w_c = w[:, n].reshape(1, dim)                   # (1, dim)
    b2 = jnp.asarray(bias, jnp.float32).reshape(1, dim)
    return w_xv, w_c, b2


# ---------------------------------------------------------------------------
# Single RHS evaluation: fc([x, v, cos(omega*t)])
# ---------------------------------------------------------------------------
def _odefunc_rhs_kernel(c_ref, z_ref, w_xv_ref, w_c_ref, b_ref, fc_ref):
    # c_ref   : SMEM (1,)        cos(omega * t)
    # z_ref   : VMEM (n, 1)      column [x | v]
    # w_xv_ref: VMEM (n, dim)    weight[:, :n].T
    # w_c_ref : VMEM (1, dim)
    # b_ref   : VMEM (1, dim)
    # fc_ref  : VMEM (1, dim)    lane-dense output at lane offset 0
    z_col = z_ref[...]                                            # (n, 1)
    # VPU broadcast-multiply + sublane reduce: no MXU for an M=1 "matmul".
    xv = jnp.sum(w_xv_ref[...] * z_col, axis=0, keepdims=True)    # (1, dim)
    fc_ref[...] = xv + c_ref[0] * w_c_ref[...] + b_ref[...]


@jax.jit
def odefunc_forward(t, z, w_xv, w_c, b2):
    """Pallas equivalent of ODEfunc(dim).forward(t, z) with pre-split params."""
    n, dim = w_xv.shape
    cutoff = n // 2
    z = jnp.asarray(z, jnp.float32)
    assert z.shape[0] == n
    c_arr = jnp.cos(jnp.float32(OMEGA) * jnp.asarray(t, jnp.float32)).reshape(1)
    z_col = z.reshape(n, 1)

    fc = pl.pallas_call(
        _odefunc_rhs_kernel,
        out_shape=jax.ShapeDtypeStruct((1, dim), jnp.float32),
        in_specs=[
            pl.BlockSpec(memory_space=pltpu.MemorySpace.SMEM),   # cos(omega*t)
            pl.BlockSpec(memory_space=pltpu.MemorySpace.VMEM),   # z column
            pl.BlockSpec(memory_space=pltpu.MemorySpace.VMEM),   # W_xv
            pl.BlockSpec(memory_space=pltpu.MemorySpace.VMEM),   # w_c
            pl.BlockSpec(memory_space=pltpu.MemorySpace.VMEM),   # bias
        ],
        out_specs=pl.BlockSpec(memory_space=pltpu.MemorySpace.VMEM),
    )(c_arr, z_col, w_xv, w_c, b2)

    # v is a pure copy of z[cutoff:]; concatenated here so the kernel's only
    # output starts at lane 0 (no masked / misaligned partial stores).
    return jnp.concatenate([z[cutoff:], fc.reshape(dim)])


# ---------------------------------------------------------------------------
# Fused fixed-step explicit-Euler integrator: whole solve in ONE pallas_call.
# Valid when the system is square: cutoff == dim, which with Linear(3*dim, dim)
# forces dim == 1 (the vdp_sonode configuration).
# ---------------------------------------------------------------------------
def _odefunc_euler_kernel(num_steps, dt_ref, ctab_ref, z0_ref,
                          w_xv_ref, w_c_ref, b_ref, zf_ref):
    # dt_ref  : SMEM (1,)            step size
    # ctab_ref: SMEM (num_steps,)    cos(omega * t_i) for every step
    # z0_ref  : VMEM (1, 2)          [x0, v0]
    # w_xv_ref: VMEM (2, 1); w_c_ref, b_ref: VMEM (1, 1); zf_ref: VMEM (1, 2)
    dt = dt_ref[0]
    w_x = w_xv_ref[0:1, :]            # (1, 1) — loaded once, vreg-resident
    w_v = w_xv_ref[1:2, :]            # (1, 1)
    w_c = w_c_ref[...]                # (1, 1)
    b = b_ref[...]                    # (1, 1)
    x0 = z0_ref[:, 0:1]
    v0 = z0_ref[:, 1:2]

    def body(i, carry):
        x, v = carry
        c_val = ctab_ref[i]                                   # SMEM scalar read
        fc = x * w_x + v * w_v + c_val * w_c + b              # VPU-only RHS
        return (x + dt * v, v + dt * fc)

    # Sequential dependence -> unroll only trims loop/branch overhead, but the
    # per-step math is a handful of (1,1) vreg ops so that overhead matters.
    xf, vf = lax.fori_loop(0, num_steps, body, (x0, v0), unroll=8)
    zf_ref[...] = jnp.concatenate([xf, vf], axis=1)           # one store


@functools.partial(jax.jit, static_argnums=(2,))
def odefunc_integrate_euler(t0, dt, num_steps, z0, w_xv, w_c, b2):
    """Integrate z' = ODEfunc(t, z) with `num_steps` Euler steps in ONE kernel."""
    n, dim = w_xv.shape
    cutoff = n // 2
    assert cutoff == dim == 1, "fused integration requires dim == 1 (square system)"

    t0 = jnp.asarray(t0, jnp.float32)
    dt = jnp.asarray(dt, jnp.float32)
    ts = t0 + dt * jnp.arange(num_steps, dtype=jnp.float32)
    ctab = jnp.cos(jnp.float32(OMEGA) * ts)                   # one vectorized op / solve
    dt_arr = dt.reshape(1)
    z_row = jnp.asarray(z0, jnp.float32).reshape(1, n)

    kernel = functools.partial(_odefunc_euler_kernel, num_steps)
    zf = pl.pallas_call(
        kernel,
        out_shape=jax.ShapeDtypeStruct((1, n), jnp.float32),
        in_specs=[
            pl.BlockSpec(memory_space=pltpu.MemorySpace.SMEM),   # dt
            pl.BlockSpec(memory_space=pltpu.MemorySpace.SMEM),   # cos table
            pl.BlockSpec(memory_space=pltpu.MemorySpace.VMEM),   # z0
            pl.BlockSpec(memory_space=pltpu.MemorySpace.VMEM),   # W_xv
            pl.BlockSpec(memory_space=pltpu.MemorySpace.VMEM),   # w_c
            pl.BlockSpec(memory_space=pltpu.MemorySpace.VMEM),   # bias
        ],
        out_specs=pl.BlockSpec(memory_space=pltpu.MemorySpace.VMEM),
    )(dt_arr, ctab, z_row, w_xv, w_c, b2)
    return zf.reshape(n)


if __name__ == "__main__":
    # The vdp_sonode experiment uses dim = 1, so z has length 2 (position, velocity).
    dim = 1
    cutoff = (3 * dim - 1) // 2          # == 1  -> len(z) == 2
    n = 2 * cutoff

    key = jax.random.PRNGKey(0)
    kz, kw, kb = jax.random.split(key, 3)

    z = jax.random.normal(kz, (n,), dtype=jnp.float32)
    bound = 1.0 / np.sqrt(3 * dim)       # nn.Linear-style uniform init bound
    weight = jax.random.uniform(kw, (dim, 3 * dim), dtype=jnp.float32,
                                minval=-bound, maxval=bound)
    bias = jax.random.uniform(kb, (dim,), dtype=jnp.float32,
                              minval=-bound, maxval=bound)
    t = jnp.float32(0.7)

    # One-time parameter prep (hoisted out of the per-step path).
    w_xv, w_c, b2 = prepare_odefunc_params(weight, bias)

    # --- 1) single RHS evaluation ------------------------------------------
    out = jax.block_until_ready(odefunc_forward(t, z, w_xv, w_c, b2))

    x, v = z[:cutoff], z[cutoff:]
    z_ = jnp.concatenate([x, v, jnp.cos(jnp.float32(OMEGA) * t)[None]])
    ref = jnp.concatenate([v, weight @ z_ + bias])
    np.testing.assert_allclose(np.asarray(out), np.asarray(ref),
                               rtol=1e-5, atol=1e-5)

    # --- 2) fused Euler solve (whole integration loop in one pallas_call) ---
    t0, dt_f, num_steps = 0.0, 0.05, 64
    zf = jax.block_until_ready(
        odefunc_integrate_euler(t0, dt_f, num_steps, z, w_xv, w_c, b2))

    def ref_rhs(tt, zz):
        xx, vv = zz[:cutoff], zz[cutoff:]
        zz_ = jnp.concatenate([xx, vv, jnp.cos(jnp.float32(OMEGA) * tt)[None]])
        return jnp.concatenate([vv, weight @ zz_ + bias])

    def ref_body(i, zz):
        tt = jnp.float32(t0) + jnp.float32(dt_f) * i.astype(jnp.float32)
        return zz + jnp.float32(dt_f) * ref_rhs(tt, zz)

    zf_ref = lax.fori_loop(0, num_steps, ref_body, z)
    np.testing.assert_allclose(np.asarray(zf), np.asarray(zf_ref),
                               rtol=1e-4, atol=1e-5)

    # TODO(synk): self.nfe (host-side Python call counter) has no in-kernel
    # equivalent and is intentionally not modeled.
    print("KERNEL_OK")
</pallas_src>

<mosaic_0001>
module attributes {stable_mosaic.version = 11 : i64} {
  func.func @_odefunc_rhs_kernel(%arg0: memref<1xf32, #tpu.memory_space<smem>>, %arg1: memref<2x1xf32, #tpu.memory_space<vmem>>, %arg2: memref<2x1xf32, #tpu.memory_space<vmem>>, %arg3: memref<1x1xf32, #tpu.memory_space<vmem>>, %arg4: memref<1x1xf32, #tpu.memory_space<vmem>>, %arg5: memref<1x1xf32, #tpu.memory_space<vmem>>) attributes {dimension_semantics = [], scalar_prefetch = 0 : i64, scratch_operands = 0 : i64, tpu.core_type = #tpu.core_type<tc>} {
    %c0 = arith.constant 0 : index
    %c0_0 = arith.constant 0 : index
    %0 = vector.load %arg1[%c0, %c0_0] : memref<2x1xf32, #tpu.memory_space<vmem>>, vector<2x1xf32>
    %c0_1 = arith.constant 0 : index
    %c0_2 = arith.constant 0 : index
    %1 = vector.load %arg2[%c0_1, %c0_2] : memref<2x1xf32, #tpu.memory_space<vmem>>, vector<2x1xf32>
    %2 = arith.mulf %1, %0 : vector<2x1xf32>
    %cst = arith.constant dense<0.000000e+00> : vector<1xf32>
    %3 = vector.multi_reduction <add>, %2, %cst [0] : vector<2x1xf32> to vector<1xf32>
    %4 = vector.shape_cast %3 : vector<1xf32> to vector<1x1xf32>
    %c0_3 = arith.constant 0 : index
    %5 = memref.load %arg0[%c0_3] : memref<1xf32, #tpu.memory_space<smem>>
    %c0_4 = arith.constant 0 : index
    %c0_5 = arith.constant 0 : index
    %6 = vector.load %arg3[%c0_4, %c0_5] : memref<1x1xf32, #tpu.memory_space<vmem>>, vector<1x1xf32>
    %7 = vector.broadcast %5 : f32 to vector<1x1xf32>
    %8 = arith.mulf %7, %6 : vector<1x1xf32>
    %9 = arith.addf %4, %8 : vector<1x1xf32>
    %c0_6 = arith.constant 0 : index
    %c0_7 = arith.constant 0 : index
    %10 = vector.load %arg4[%c0_6, %c0_7] : memref<1x1xf32, #tpu.memory_space<vmem>>, vector<1x1xf32>
    %11 = arith.addf %9, %10 : vector<1x1xf32>
    %c0_8 = arith.constant 0 : index
    %c0_9 = arith.constant 0 : index
    %12 = vector.load %arg5[%c0_8, %c0_9] : memref<1x1xf32, #tpu.memory_space<vmem>>, vector<1x1xf32>
    tpu.vector_store %arg5[%c0_8, %c0_9], %11 {strides = array<i32>} : memref<1x1xf32, #tpu.memory_space<vmem>>, vector<1x1xf32>,
    return
  }
}

</mosaic_0001>

<llo_original>
// kernel: odefunc_forward.1
$region0: #{odefunc_forward.1}
  #allocation0 [shape = 'u32[]', space=smem, size = 0x4, offset = 0x4, fixed_abs, tag = 'smem constant byte address 0x4 - core index']
  #allocation1 [shape = 'u32[144,128]{1,0:T(1,128)}', space=vmem, size = 0x12000, scoped, tag = 'internal scratch']
  #allocation2 [shape = 'f32[1]{0:T(128)S(6)}', space=smem, size = 0x200, scoped, tag = 'scoped memory for odefunc_forward.1']
  #allocation3 [shape = 'f32[1,1]{1,0:T(1,128)S(1)}', space=vmem, size = 0x200, scoped, tag = 'scoped memory for odefunc_forward.1']
  #allocation4 [shape = 'f32[1,1]{1,0:T(1,128)S(1)}', space=vmem, size = 0x200, scoped, tag = 'scoped memory for odefunc_forward.1']
  %s0 = inlined_call_operand.<no memory space> [shape: f32[1], index: 0, kind: input, shape index: {}]
  %s1 = inlined_call_operand.vmem [shape: f32[2,1], index: 1, kind: input, shape index: {}]
  %s2 = inlined_call_operand.vmem [shape: f32[2,1], index: 2, kind: input, shape index: {}]
  %s3 = inlined_call_operand.<no memory space> [shape: f32[1,1], index: 3, kind: input, shape index: {}]
  %s4 = inlined_call_operand.<no memory space> [shape: f32[1,1], index: 4, kind: input, shape index: {}]
  %s5 = inlined_call_operand.hbm [shape: f32[1,1], index: 5, kind: output, shape index: {}]
  %s6 = sld [smem:[#allocation0]]
  $region30: #{odefunc_forward.1} parent=0
    _
  %s8 = ssub.s32 1, %s6
  %s9 = scalar_select 0, %s8, %s6
  %10 = sst [smem:[#allocation2]] %s0
  %v11 = vstv %s3
  %12 = vst [vmem:[#allocation3] sm:$0x1] %v11
  %v13 = vstv %s4
  %14 = vst [vmem:[#allocation4] sm:$0x1] %v13
  $region1: #{odefunc_forward.1} parent=0
    #allocation5 [shape = 'u8[512]{0}', space=vmem, size = 0x400, scoped, tag = 'output window, operand 0, single buffered']
    #allocation6 [shape = 's32[1]{0}', space=sflag, size = 0x4, scoped, tag = 'scoped memory for odefunc_forward.1']
    %15 = vsyncpa [#allocation6], 0
    // Predicated region
    $region2: #{odefunc_forward.1} parent=1 // pred_check
      _
    $region3: #{odefunc_forward.1} parent=1 // pred_check_branch
      %17 = sbr.rel (0) target = $region5
    $region4: #{odefunc_forward.1} parent=1 // pred_region
      _
    $region5: #{odefunc_forward.1} parent=1 // pred_fallthru
      _
    // Predicated region
    $region6: #{odefunc_forward.1} parent=1 // pred_check
      _
    $region7: #{odefunc_forward.1} parent=1 // pred_check_branch
      %19 = sbr.rel (0) target = $region9
    $region8: #{odefunc_forward.1} parent=1 // pred_region
      _
    $region9: #{odefunc_forward.1} parent=1 // pred_fallthru
      _
    // Predicated region
    $region10: #{odefunc_forward.1} parent=1 // pred_check
      _
    $region11: #{odefunc_forward.1} parent=1 // pred_check_branch
      %21 = sbr.rel (0) target = $region13
    $region12: #{odefunc_forward.1} parent=1 // pred_region
      _
    $region13: #{odefunc_forward.1} parent=1 // pred_fallthru
      _
    // Predicated region
    $region14: #{odefunc_forward.1} parent=1 // pred_check
      _
    $region15: #{odefunc_forward.1} parent=1 // pred_check_branch
      %23 = sbr.rel (0) target = $region17
    $region16: #{odefunc_forward.1} parent=1 // pred_region
      _
    $region17: #{odefunc_forward.1} parent=1 // pred_fallthru
      _
    // Predicated region
    $region18: #{odefunc_forward.1} parent=1 // pred_check
      _
    $region19: #{odefunc_forward.1} parent=1 // pred_check_branch
      %25 = sbr.rel (0) target = $region21
    $region20: #{odefunc_forward.1} parent=1 // pred_region
      _
    $region21: #{odefunc_forward.1} parent=1 // pred_fallthru
      _
    %v26 = vld [vmem:[%s1] sm:$0x3]
    %v27 = vld [vmem:[%s2] sm:$0x3]
    %v28 = vmul.f32 %v27, %v26
    %vm29 = vcmask 1024
    %v30 = vsel %vm29, %v28, 0.0
    %v31 = vrot.slane %v30, 4
    %v32 = vadd.f32 %v30, %v31
    %v33 = vrot.slane %v32, 2
    %v34 = vadd.f32 %v32, %v33
    %v35 = vrot.slane %v34, 1
    %v36 = vadd.f32 %v34, %v35
    %s37 = sld [smem:[#allocation2]]
    %v38 = vld [vmem:[#allocation3] sm:$0x1]
    %v39 = vstv %s37
    %v40 = vmul.f32 %v39, %v38
    %v41 = vadd.f32 %v36, %v40
    %v42 = vld [vmem:[#allocation4] sm:$0x1]
    %v43 = vadd.f32 %v41, %v42
    %vm44 = vcmask 0
    %45 = vst.msk [vmem:[#allocation5] sm:$0x1] %vm44, %v43
    // Predicated region
    $region22: #{odefunc_forward.1} parent=1 // pred_check
      _
    $region23: #{odefunc_forward.1} parent=1 // pred_check_branch
      %47 = sbr.rel (0) target = $region25
    $region24: #{odefunc_forward.1} parent=1 // pred_region
      %s49 = ssub.s32 16, 16
      %50 = vsyncadd [#allocation6], %s49
      %s52 = sshll.u32 [#allocation5], 4
      %s53 = int_to_ptr.vmem [resolvable:$true] %s52
      %55 = dma.vmem_to_hbm [thread:$0]  %s53, 16, %s5, [#allocation6]
    $region25: #{odefunc_forward.1} parent=1 // pred_fallthru
      _
    // Predicated region
    $region26: #{odefunc_forward.1} parent=1 // pred_check
      _
    $region27: #{odefunc_forward.1} parent=1 // pred_check_branch
      %57 = sbr.rel (0) target = $region29
    $region28: #{odefunc_forward.1} parent=1 // pred_region
      %58 = dma.done [#allocation6], 16
    $region29: #{odefunc_forward.1} parent=1 // pred_fallthru
      _
    %59 = vsyncpa [#allocation6], 1

</llo_original>
